<compile_context>
chip_gen: v7x
topology: tpu7x:2x2x1
jax: 0.10.0
libtpu: 0.0.40
codegen_flags: <defaults>
</compile_context>

<pallas_src>
import jax
import jax.numpy as jnp
from jax.experimental import pallas as pl
from jax.experimental.pallas import tpu as pltpu

# ----------------------- small config (STGCN-like) --------------------------
B = 2      # batch
C = 8      # channels  (c)
T = 12     # time steps
N = 16     # n_vertice (n)  -> lane width N*C = 128 (lane-dense)
KS = 3     # spatial kernel size (ks)


# ============================ Pallas kernel =================================

def _spatio_conv_kernel(x_ref, w_ref, b_ref, o_ref):
    """Fused spatio-conv tile.

    x_ref : (TM, N*C)   rows = (batch, time), lanes = n*C + channel
    w_ref : (N*C, N*C)  combined graph/channel weight (VMEM-resident)
    b_ref : (1, N*C)    per-channel bias tiled over vertices
    o_ref : (TM, N*C)   relu(x @ W + bias + x)
    """
    x = x_ref[...]
    y = jnp.dot(x, w_ref[...], preferred_element_type=jnp.float32)
    o_ref[...] = jnp.maximum(y + b_ref[...] + x, 0.0)


# ============================ wrapper ========================================

def spatio_conv_forward(x, Lk, theta, bias, *, max_row_tile=512):
    """spatio_conv_layer.forward.  x: (B, C, T, N) NCHW, returns same layout."""
    B_, C_, T_, N_ = x.shape
    x = x.astype(jnp.float32)
    Lk = Lk.astype(jnp.float32)
    theta = theta.astype(jnp.float32)
    bias = bias.astype(jnp.float32)
    NC = N_ * C_

    # Fold the two contractions into one weight (tiny, exact parameter prep):
    #   W[m*C+i, n*C+o] = sum_k Lk[k,n,m] * theta[i,o,k]
    # TODO(synk): this weight-folding einsum is parameter prep in plain JAX
    # (outside the kernel); it is constant w.r.t. the activations.
    w_big = jnp.einsum('knm,iok->mino', Lk, theta,
                       precision=jax.lax.Precision.HIGHEST).reshape(NC, NC)
    # bias along lane index n*C + o  (bias is per output channel o)
    b_lane = jnp.tile(bias.reshape(C_), (N_,)).reshape(1, NC)

    # Lane-dense activation layout: rows = (b, t), lanes = m*C + i  (128 here).
    x_ld = jnp.transpose(x, (0, 2, 3, 1)).reshape(B_ * T_, NC)

    M = B_ * T_
    # Adaptive row tiling: whole problem in one grid step when it fits;
    # otherwise tile rows (multiple of 8, capped so VMEM stays comfortable).
    row_tile = min(((M + 7) // 8) * 8, max_row_tile)
    m_pad = pl.cdiv(M, row_tile) * row_tile
    if m_pad != M:
        x_ld = jnp.pad(x_ld, ((0, m_pad - M), (0, 0)))

    out_ld = pl.pallas_call(
        _spatio_conv_kernel,
        out_shape=jax.ShapeDtypeStruct((m_pad, NC), jnp.float32),
        grid=(m_pad // row_tile,),
        in_specs=[pl.BlockSpec((row_tile, NC), lambda i: (i, 0)),
                  pl.BlockSpec((NC, NC), lambda i: (0, 0)),
                  pl.BlockSpec((1, NC), lambda i: (0, 0))],
        out_specs=pl.BlockSpec((row_tile, NC), lambda i: (i, 0)),
        compiler_params=pltpu.CompilerParams(
            dimension_semantics=("parallel",)),
    )(x_ld, w_big, b_lane)

    out_ld = out_ld[:M]
    return jnp.transpose(out_ld.reshape(B_, T_, N_, C_), (0, 3, 1, 2))


# ================================ main =======================================

if __name__ == "__main__":
    key = jax.random.PRNGKey(0)
    kx, kl, kt, kb = jax.random.split(key, 4)

    x = jax.random.normal(kx, (B, C, T, N), dtype=jnp.float32)
    Lk = 0.2 * jax.random.normal(kl, (KS, N, N), dtype=jnp.float32)
    theta = 0.1 * jax.random.normal(kt, (C, C, KS), dtype=jnp.float32)
    bias = 0.1 * jax.random.normal(kb, (1, C, 1, 1), dtype=jnp.float32)

    fwd = jax.jit(spatio_conv_forward)
    out = jax.block_until_ready(fwd(x, Lk, theta, bias))

    # Pure-JAX reference of the PyTorch forward (semantics check).
    x_c = jnp.einsum('knm,bitm->bitkn', Lk, x,
                     precision=jax.lax.Precision.HIGHEST)
    x_gc = jnp.einsum('iok,bitkn->botn', theta, x_c,
                      precision=jax.lax.Precision.HIGHEST) + bias
    ref = jnp.maximum(x_gc + x, 0.0)

    assert out.shape == (B, C, T, N), out.shape
    assert bool(jnp.all(jnp.isfinite(out)))
    assert bool(jnp.allclose(out, ref, rtol=2e-2, atol=2e-2)), \
        float(jnp.max(jnp.abs(out - ref)))
    print("KERNEL_OK")
</pallas_src>

<mosaic_0001>
module attributes {stable_mosaic.version = 11 : i64} {
  func.func @_spatio_conv_kernel(%arg0: i32, %arg1: memref<24x128xf32, #tpu.memory_space<vmem>>, %arg2: memref<128x128xf32, #tpu.memory_space<vmem>>, %arg3: memref<1x128xf32, #tpu.memory_space<vmem>>, %arg4: memref<24x128xf32, #tpu.memory_space<vmem>>) attributes {dimension_semantics = [#tpu.dimension_semantics<parallel>], iteration_bounds = array<i64: 1>, scalar_prefetch = 0 : i64, scratch_operands = 0 : i64, tpu.core_type = #tpu.core_type<tc>, window_params = [{transform_indices = @transform_0, window_bounds = array<i64: 24, 128>}, {pipeline_mode = #tpu.pipeline_mode<synchronous>, transform_indices = @transform_1, window_bounds = array<i64: 128, 128>}, {pipeline_mode = #tpu.pipeline_mode<synchronous>, transform_indices = @transform_2, window_bounds = array<i64: 1, 128>}, {transform_indices = @transform_3, window_bounds = array<i64: 24, 128>}]} {
    %c0 = arith.constant 0 : index
    %c0_0 = arith.constant 0 : index
    %0 = vector.load %arg1[%c0, %c0_0] : memref<24x128xf32, #tpu.memory_space<vmem>>, vector<24x128xf32>
    %c0_1 = arith.constant 0 : index
    %c0_2 = arith.constant 0 : index
    %1 = vector.load %arg2[%c0_1, %c0_2] : memref<128x128xf32, #tpu.memory_space<vmem>>, vector<128x128xf32>
    %cst = arith.constant dense<0.000000e+00> : vector<24x128xf32>
    %2 = tpu.matmul %0, %1, %cst {dimension_numbers = #tpu.dot_dimension_numbers<[1], [0], [0], [1], [0, 0, 1, 1], [], []>} : vector<24x128xf32>, vector<128x128xf32>, vector<24x128xf32> -> vector<24x128xf32>
    %c0_3 = arith.constant 0 : index
    %c0_4 = arith.constant 0 : index
    %3 = vector.load %arg3[%c0_3, %c0_4] : memref<1x128xf32, #tpu.memory_space<vmem>>, vector<1x128xf32>
    %4 = vector.broadcast %3 : vector<1x128xf32> to vector<24x128xf32>
    %5 = arith.addf %2, %4 : vector<24x128xf32>
    %6 = arith.addf %5, %0 : vector<24x128xf32>
    %cst_5 = arith.constant 0.000000e+00 : f32
    %7 = vector.broadcast %cst_5 : f32 to vector<24x128xf32>
    %8 = arith.maximumf %6, %7 : vector<24x128xf32>
    %c0_6 = arith.constant 0 : index
    %c0_7 = arith.constant 0 : index
    %9 = vector.load %arg4[%c0_6, %c0_7] : memref<24x128xf32, #tpu.memory_space<vmem>>, vector<24x128xf32>
    tpu.vector_store %arg4[%c0_6, %c0_7], %8 {strides = array<i32>} : memref<24x128xf32, #tpu.memory_space<vmem>>, vector<24x128xf32>,
    return
  }
  func.func @transform_0(%arg0: i32) -> (i32, i32) {
    %c0_i32 = arith.constant 0 : i32
    %c0_i32_0 = arith.constant 0 : i32
    return %arg0, %c0_i32 : i32, i32
  }
  func.func @transform_1(%arg0: i32) -> (i32, i32) {
    %c0_i32 = arith.constant 0 : i32
    %c0_i32_0 = arith.constant 0 : i32
    %c0_i32_1 = arith.constant 0 : i32
    return %c0_i32, %c0_i32_0 : i32, i32
  }
  func.func @transform_2(%arg0: i32) -> (i32, i32) {
    %c0_i32 = arith.constant 0 : i32
    %c0_i32_0 = arith.constant 0 : i32
    %c0_i32_1 = arith.constant 0 : i32
    return %c0_i32, %c0_i32_0 : i32, i32
  }
  func.func @transform_3(%arg0: i32) -> (i32, i32) {
    %c0_i32 = arith.constant 0 : i32
    %c0_i32_0 = arith.constant 0 : i32
    return %arg0, %c0_i32 : i32, i32
  }
}

</mosaic_0001>

<llo_original>
// kernel: tile.6
$region0: #{tile.6}
  #allocation0 [shape = 's32[1]{0}', space=sflag, size = 0x4, scoped, tag = 'scoped memory for tile.6']
  %s0 = inlined_call_operand.vmem [shape: f32[8], index: 0, kind: input, shape index: {}]
  %s1 = inlined_call_operand.vmem [shape: f32[16,8], index: 1, kind: output, shape index: {}]
  // Predicated region
  $region2: #{tile.6} parent=0 // pred_check
    _
  $region3: #{tile.6} parent=0 // pred_check_branch
    %3 = sbr.rel (0) target = $region5
  $region4: #{tile.6} parent=0 // pred_region
    _
  $region5: #{tile.6} parent=0 // pred_fallthru
    _
  %v4 = vld [vmem:[%s0] ss:$0 sm:$0xff]
  %5 = vst [vmem:[%s1] sm:$0xff] %v4
  %s6 = scalar_lea.vmem %s1, 8
  %7 = vst [vmem:[%s6] sm:$0xff] %v4

// kernel: tile.7
$region0: #{tile.7}
  %s0 = inlined_call_operand.vmem [shape: f32[16,8], index: 0, kind: input, shape index: {}]
  %s1 = inlined_call_operand.vmem [shape: f32[1,128], index: 1, kind: output, shape index: {}]
  $region1: #{tile.7} parent=0
    #allocation0 [shape = 'u8[4096]{0}', space=vmem, size = 0x1000, scoped, tag = 'scoped mem for output reshape']
    %v2 = vld [vmem:[%s0] sm:$0x1]
    %vm3 = vcmask 64512
    %4 = vst.msk [vmem:[#allocation0] sm:$0x1] %vm3, %v2
    %s5 = scalar_lea.vmem %s0, 15
    %v6 = vld [vmem:[%s5] sm:$0x1]
    %7 = vrot.lane.b32.xlu0 %v6, 120
    %v8 = vpop.permute.xlu0 %7
    %vm9 = vcmask 1048512
    %10 = vst.msk [vmem:[#allocation0] sm:$0x1] %vm9, %v8
    %s11 = scalar_lea.vmem %s0, 14
    %v12 = vld [vmem:[%s11] sm:$0x1]
    %13 = vrot.lane.b32.xlu0 %v12, 112
    %v14 = vpop.permute.xlu0 %13
    %vm15 = vcmask 982912
    %16 = vst.msk [vmem:[#allocation0] sm:$0x1] %vm15, %v14
    %s17 = scalar_lea.vmem %s0, 13
    %v18 = vld [vmem:[%s17] sm:$0x1]
    %19 = vrot.lane.b32.xlu0 %v18, 104
    %v20 = vpop.permute.xlu0 %19
    %vm21 = vcmask 917312
    %22 = vst.msk [vmem:[#allocation0] sm:$0x1] %vm21, %v20
    %s23 = scalar_lea.vmem %s0, 12
    %v24 = vld [vmem:[%s23] sm:$0x1]
    %25 = vrot.lane.b32.xlu0 %v24, 96
    %v26 = vpop.permute.xlu0 %25
    %vm27 = vcmask 851712
    %28 = vst.msk [vmem:[#allocation0] sm:$0x1] %vm27, %v26
    %s29 = scalar_lea.vmem %s0, 11
    %v30 = vld [vmem:[%s29] sm:$0x1]
    %31 = vrot.lane.b32.xlu0 %v30, 88
    %v32 = vpop.permute.xlu0 %31
    %vm33 = vcmask 786112
    %34 = vst.msk [vmem:[#allocation0] sm:$0x1] %vm33, %v32
    %s35 = scalar_lea.vmem %s0, 10
    %v36 = vld [vmem:[%s35] sm:$0x1]
    %37 = vrot.lane.b32.xlu0 %v36, 80
    %v38 = vpop.permute.xlu0 %37
    %vm39 = vcmask 720512
    %40 = vst.msk [vmem:[#allocation0] sm:$0x1] %vm39, %v38
    %s41 = scalar_lea.vmem %s0, 9
    %v42 = vld [vmem:[%s41] sm:$0x1]
    %43 = vrot.lane.b32.xlu0 %v42, 72
    %v44 = vpop.permute.xlu0 %43
    %vm45 = vcmask 654912
    %46 = vst.msk [vmem:[#allocation0] sm:$0x1] %vm45, %v44
    %s47 = scalar_lea.vmem %s0, 8
    %v48 = vld [vmem:[%s47] sm:$0x1]
    %49 = vrot.lane.b32.xlu0 %v48, 64
    %v50 = vpop.permute.xlu0 %49
    %vm51 = vcmask 589312
    %52 = vst.msk [vmem:[#allocation0] sm:$0x1] %vm51, %v50
    %s53 = scalar_lea.vmem %s0, 7
    %v54 = vld [vmem:[%s53] sm:$0x1]
    %55 = vrot.lane.b32.xlu0 %v54, 56
    %v56 = vpop.permute.xlu0 %55
    %vm57 = vcmask 523712
    %58 = vst.msk [vmem:[#allocation0] sm:$0x1] %vm57, %v56
    %s59 = scalar_lea.vmem %s0, 6
    %v60 = vld [vmem:[%s59] sm:$0x1]
    %61 = vrot.lane.b32.xlu0 %v60, 48
    %v62 = vpop.permute.xlu0 %61
    %vm63 = vcmask 458112
    %64 = vst.msk [vmem:[#allocation0] sm:$0x1] %vm63, %v62
    %s65 = scalar_lea.vmem %s0, 5
    %v66 = vld [vmem:[%s65] sm:$0x1]
    %67 = vrot.lane.b32.xlu0 %v66, 40
    %v68 = vpop.permute.xlu0 %67
    %vm69 = vcmask 392512
    %70 = vst.msk [vmem:[#allocation0] sm:$0x1] %vm69, %v68
    %s71 = scalar_lea.vmem %s0, 4
    %v72 = vld [vmem:[%s71] sm:$0x1]
    %73 = vrot.lane.b32.xlu0 %v72, 32
    %v74 = vpop.permute.xlu0 %73
    %vm75 = vcmask 326912
    %76 = vst.msk [vmem:[#allocation0] sm:$0x1] %vm75, %v74
    %s77 = scalar_lea.vmem %s0, 3
    %v78 = vld [vmem:[%s77] sm:$0x1]
    %79 = vrot.lane.b32.xlu0 %v78, 24
    %v80 = vpop.permute.xlu0 %79
    %vm81 = vcmask 261312
    %82 = vst.msk [vmem:[#allocation0] sm:$0x1] %vm81, %v80
    %s83 = scalar_lea.vmem %s0, 2
    %v84 = vld [vmem:[%s83] sm:$0x1]
    %85 = vrot.lane.b32.xlu0 %v84, 16
    %v86 = vpop.permute.xlu0 %85
    %vm87 = vcmask 195712
    %88 = vst.msk [vmem:[#allocation0] sm:$0x1] %vm87, %v86
    %s89 = scalar_lea.vmem %s0, 1
    %v90 = vld [vmem:[%s89] sm:$0x1]
    %91 = vrot.lane.b32.xlu0 %v90, 8
    %v92 = vpop.permute.xlu0 %91
    %vm93 = vcmask 130112
    %94 = vst.msk [vmem:[#allocation0] sm:$0x1] %vm93, %v92
    %s96 = sshllo.u32 0, 1
    %v98 = vld [vmem:[#allocation0] sm:%s96]
    %s99 = sshllo.u32 0, 1
    %100 = vst [vmem:[%s1] sm:%s99] %v98

// kernel: spatio_conv_forward.1
$region0: #{spatio_conv_forward.1}
  #allocation0 [shape = 'u32[]', space=smem, size = 0x4, offset = 0x4, fixed_abs, tag = 'smem constant byte address 0x4 - core index']
  #allocation1 [shape = 'u32[144,128]{1,0:T(1,128)}', space=vmem, size = 0x12000, scoped, tag = 'internal scratch']
  %s0 = inlined_call_operand.vmem [shape: f32[24,128], index: 0, kind: input, shape index: {}]
  %s1 = inlined_call_operand.vmem [shape: f32[128,128], index: 1, kind: input, shape index: {}]
  %s2 = inlined_call_operand.vmem [shape: f32[1,128], index: 2, kind: input, shape index: {}]
  %s3 = inlined_call_operand.vmem [shape: f32[24,128], index: 3, kind: output, shape index: {}]
  %s4 = sld [smem:[#allocation0]]
  $region22: #{spatio_conv_forward.1} parent=0
    _
  %s6 = ssub.s32 1, %s4
  %s7 = scalar_select 0, %s6, %s4
  // Predicated region
  $region2: #{spatio_conv_forward.1} parent=0 // pred_check
    _
  $region3: #{spatio_conv_forward.1} parent=0 // pred_check_branch
    %9 = sbr.rel (0) target = $region5
  $region4: #{spatio_conv_forward.1} parent=0 // pred_region
    _
  $region5: #{spatio_conv_forward.1} parent=0 // pred_fallthru
    _
  // Predicated region
  $region6: #{spatio_conv_forward.1} parent=0 // pred_check
    _
  $region7: #{spatio_conv_forward.1} parent=0 // pred_check_branch
    %11 = sbr.rel (0) target = $region9
  $region8: #{spatio_conv_forward.1} parent=0 // pred_region
    _
  $region9: #{spatio_conv_forward.1} parent=0 // pred_fallthru
    _
  // Predicated region
  $region10: #{spatio_conv_forward.1} parent=0 // pred_check
    _
  $region11: #{spatio_conv_forward.1} parent=0 // pred_check_branch
    %13 = sbr.rel (0) target = $region13
  $region12: #{spatio_conv_forward.1} parent=0 // pred_region
    _
  $region13: #{spatio_conv_forward.1} parent=0 // pred_fallthru
    _
  %v14 = vld [vmem:[%s0] sm:$0xff]
  %v15 = vld [vmem:[%s0 + $0x8] sm:$0xff]
  %v16 = vld [vmem:[%s0 + $0x10] sm:$0xff]
  %v17 = vld [vmem:[%s1] sm:$0xff]
  %v18 = vld [vmem:[%s1 + $0x8] sm:$0xff]
  %v19 = vld [vmem:[%s1 + $0x10] sm:$0xff]
  %v20 = vld [vmem:[%s1 + $0x18] sm:$0xff]
  %v21 = vld [vmem:[%s1 + $0x20] sm:$0xff]
  %v22 = vld [vmem:[%s1 + $0x28] sm:$0xff]
  %v23 = vld [vmem:[%s1 + $0x30] sm:$0xff]
  %v24 = vld [vmem:[%s1 + $0x38] sm:$0xff]
  %v25 = vld [vmem:[%s1 + $0x40] sm:$0xff]
  %v26 = vld [vmem:[%s1 + $0x48] sm:$0xff]
  %v27 = vld [vmem:[%s1 + $0x50] sm:$0xff]
  %v28 = vld [vmem:[%s1 + $0x58] sm:$0xff]
  %v29 = vld [vmem:[%s1 + $0x60] sm:$0xff]
  %v30 = vld [vmem:[%s1 + $0x68] sm:$0xff]
  %v31 = vld [vmem:[%s1 + $0x70] sm:$0xff]
  %v32 = vld [vmem:[%s1 + $0x78] sm:$0xff]
  %v33 = vld [vmem:[%s2] sm:$0x1]
  %v35 = vlaneseq
  %v36 = vshrl.u32 %v35, 7
  %v37 = vsub.s32 0, %v36
  %v38 = vrot.slane %v33, %v37
  %40 = vmatprep.subr.mxu0 0.0
  %41 = vmatpush1.msra.mxu0 %v17
  %42 = vmatprep.subr.mxu0 0.0
  %43 = vmatpush1.msra.mxu0 %v18
  %44 = vmatprep.subr.mxu0 0.0
  %45 = vmatpush1.msra.mxu0 %v19
  %46 = vmatprep.subr.mxu0 0.0
  %47 = vmatpush1.msra.mxu0 %v20
  %48 = vmatprep.subr.mxu0 0.0
  %49 = vmatpush1.msra.mxu0 %v21
  %50 = vmatprep.subr.mxu0 0.0
  %51 = vmatpush1.msra.mxu0 %v22
  %52 = vmatprep.subr.mxu0 0.0
  %53 = vmatpush1.msra.mxu0 %v23
  %54 = vmatprep.subr.mxu0 0.0
  %55 = vmatpush1.msra.mxu0 %v24
  %56 = vmatprep.subr.mxu0 0.0
  %57 = vmatpush1.msra.mxu0 %v25
  %58 = vmatprep.subr.mxu0 0.0
  %59 = vmatpush1.msra.mxu0 %v26
  %60 = vmatprep.subr.mxu0 0.0
  %61 = vmatpush1.msra.mxu0 %v27
  %62 = vmatprep.subr.mxu0 0.0
  %63 = vmatpush1.msra.mxu0 %v28
  %64 = vmatprep.subr.mxu0 0.0
  %65 = vmatpush1.msra.mxu0 %v29
  %66 = vmatprep.subr.mxu0 0.0
  %67 = vmatpush1.msra.mxu0 %v30
  %68 = vmatprep.subr.mxu0 0.0
  %69 = vmatpush1.msra.mxu0 %v31
  %70 = vmatprep.subr.mxu0 0.0
  %71 = vmatpush1.msra.mxu0 %v32
  %72 = vmatprep.subr.mxu0 0.0
  %73 = vmatpush1.msra.mxu0 0.0
  %74 = vmatprep.subr.mxu0 0.0
  %75 = vmatpush1.msra.mxu0 0.0
  %76 = vmatprep.subr.mxu0 0.0
  %77 = vmatpush1.msra.mxu0 0.0
  %78 = vmatprep.subr.mxu0 0.0
  %79 = vmatpush1.msra.mxu0 0.0
  %80 = vmatprep.subr.mxu0 0.0
  %81 = vmatpush1.msra.mxu0 0.0
  %82 = vmatprep.subr.mxu0 0.0
  %83 = vmatpush1.msra.mxu0 0.0
  %84 = vmatprep.subr.mxu0 0.0
  %85 = vmatpush1.msra.mxu0 0.0
  %86 = vmatprep.subr.mxu0 0.0
  %87 = vmatpush1.msra.mxu0 0.0
  %88 = vmatprep.subr.mxu0 0.0
  %89 = vmatpush1.msra.mxu0 0.0
  %90 = vmatprep.subr.mxu0 0.0
  %91 = vmatpush1.msra.mxu0 0.0
  %92 = vmatprep.subr.mxu0 0.0
  %93 = vmatpush1.msra.mxu0 0.0
  %94 = vmatprep.subr.mxu0 0.0
  %95 = vmatpush1.msra.mxu0 0.0
  %96 = vmatprep.subr.mxu0 0.0
  %97 = vmatpush1.msra.mxu0 0.0
  %98 = vmatprep.subr.mxu0 0.0
  %99 = vmatpush1.msra.mxu0 0.0
  %100 = vmatprep.subr.mxu0 0.0
  %101 = vmatpush1.msra.mxu0 0.0
  %102 = vmatprep.subr.mxu0 0.0
  %103 = vmatpush1.msra.mxu0 0.0
  %104 = vmatprep.mubr.f32.mxu0 0.0
  %105 = vmatmul.mubr.f32.gmra.mrb[0].mxu0 %v14
  %v106 = vpop.f32.mrb[0].mxu0
  %v107 = vadd.f32 %v38, %v106
  %v108 = vpop.f32.mrb[0].mxu0
  %109 = vmatprep.mubr.f32.mxu0 0.0
  %110 = vmatmul.mubr.f32.gmra.mrb[0].mxu0 %v15
  %v111 = vpop.f32.mrb[0].mxu0
  %v112 = vadd.f32 %v38, %v111
  %v113 = vpop.f32.mrb[0].mxu0
  %114 = vmatprep.mubr.f32.mxu0 0.0
  %115 = vmatmul.mubr.f32.gmra.mrb[0].mxu0 %v16
  %v116 = vpop.f32.mrb[0].mxu0
  %v117 = vadd.f32 %v38, %v116
  %v118 = vpop.f32.mrb[0].mxu0
  %119 = vdwg.mxu0
  %v120 = vadd.f32 %v107, %v14
  %v121 = vadd.f32 %v112, %v15
  %v122 = vadd.f32 %v117, %v16
  %v123 = vmax.f32 %v120, 0.0
  %v124 = vmax.f32 %v121, 0.0
  %v125 = vmax.f32 %v122, 0.0
  %126 = vst [vmem:[%s3] sm:$0xff] %v123
  %127 = vst [vmem:[%s3 + $0x8] sm:$0xff] %v124
  %128 = vst [vmem:[%s3 + $0x10] sm:$0xff] %v125
  // Predicated region
  $region14: #{spatio_conv_forward.1} parent=0 // pred_check
    _
  $region15: #{spatio_conv_forward.1} parent=0 // pred_check_branch
    %130 = sbr.rel (0) target = $region17
  $region16: #{spatio_conv_forward.1} parent=0 // pred_region
    _
  $region17: #{spatio_conv_forward.1} parent=0 // pred_fallthru
    _
  // Predicated region
  $region18: #{spatio_conv_forward.1} parent=0 // pred_check
    _
  $region19: #{spatio_conv_forward.1} parent=0 // pred_check_branch
    %132 = sbr.rel (0) target = $region21
  $region20: #{spatio_conv_forward.1} parent=0 // pred_region
    _
  $region21: #{spatio_conv_forward.1} parent=0 // pred_fallthru
    _

</llo_original>
